<compile_context>
chip_gen: v6e
topology: v6e:2x2x1
jax: 0.10.0
libtpu: 0.0.40
codegen_flags: <defaults>
</compile_context>

<pallas_src>
import functools

import jax
import jax.numpy as jnp
from jax import lax
from jax.experimental import pallas as pl
from jax.experimental.pallas import tpu as pltpu


def _glom_conv2d_kernel(x_ref, w_ref, mask_ref, o_ref, *, b_blk, width, hw):
    # x_ref:    (B_blk, G*C_in,  H*W)  packed images, flat spatial in lanes
    # w_ref:    (G*C_out, G*C_in)      block-diagonal 1x1 weight, includes 1/9
    # mask_ref: (4, H*W)               {0,1} neighbor-validity masks
    # o_ref:    (B_blk, G*C_out, H*W)
    w = w_ref[...]                      # hoisted: loaded once per grid step
    m = mask_ref[...]
    m_left, m_right = m[0:1, :], m[1:2, :]
    m_up, m_down = m[2:3, :], m[3:4, :]

    for b in range(b_blk):              # static unroll; b_blk is small (<= 8)
        x = x_ref[b].astype(jnp.float32)                    # (G*C_in, H*W)

        # ---- separable 3x3 sum, zero padding (count_include_pad=True) ----
        # horizontal: x[h, w-1] + x[h, w] + x[h, w+1]; pltpu.roll == np.roll,
        # row-boundary lanes (incl. circular wrap) zeroed via the masks.
        left = pltpu.roll(x, 1, axis=1) * m_left
        right = pltpu.roll(x, hw - 1, axis=1) * m_right
        row_sum = left + x + right
        # vertical: rs[h-1, w] + rs[h, w] + rs[h+1, w]
        up = pltpu.roll(row_sum, width, axis=1) * m_up
        down = pltpu.roll(row_sum, hw - width, axis=1) * m_down
        pooled9 = up + row_sum + down      # = 9 * avg_pool (1/9 folded into w)

        # ---- 1x1 conv (bias=False): block-diagonal channel mix on the MXU ----
        out = jnp.dot(w, pooled9,
                      preferred_element_type=jnp.float32,
                      precision=jax.lax.Precision.HIGHEST)
        o_ref[b] = out.astype(o_ref.dtype)


def _pick_group(n, c_in, c_out, max_sublanes=128, pack=8):
    """Largest divisor g of n with g*C filling sublanes and g*C <= max_sublanes."""
    best = 1
    for g in range(1, n + 1):
        if n % g:
            continue
        if g * max(c_in, c_out) > max_sublanes:
            break
        if (g * c_in) % pack == 0 and (g * c_out) % pack == 0:
            best = g
    return best


def _pick_batch_block(num_groups, in_group_bytes, max_unroll=8,
                      target_bytes=2 << 20):
    """Groups per grid step: big DMAs (~1-2 MiB), small static unroll."""
    divisors = [d for d in range(1, num_groups + 1) if num_groups % d == 0]
    best = 1
    for d in divisors:
        if d > max_unroll:
            break
        if d > 1 and d * in_group_bytes > target_bytes:
            break
        best = d
    # v7x has 2 TensorCores sharing a chip: keep >= 2 grid steps when the data
    # allows it so the "parallel" axis can shard across both cores.
    if num_groups > 1 and num_groups // best == 1:
        smaller = [d for d in divisors if d < num_groups and d <= max_unroll]
        best = smaller[-1] if smaller else 1
    return best


def _vmem_budget_bytes():
    try:
        return int(pltpu.get_tpu_info().vmem_capacity_bytes * 3 // 4)
    except Exception:
        return 48 << 20   # conservative: fits v7x's 64 MiB physical VMEM


def glom_conv2d(x_nchw, w_oc):
    """GLOM_Conv2d forward.

    x_nchw: (N, C_in, H, W); w_oc: (C_out, C_in) (the PyTorch Conv2d weight of
    shape (C_out, C_in, 1, 1) with the trailing 1x1 dims dropped)."""
    n, c_in, height, width = x_nchw.shape
    c_out = w_oc.shape[0]
    hw = height * width

    # ---- pack batch into sublanes: (N, C, HW) -> (N/G, G*C, HW) (free reshape)
    g = _pick_group(n, c_in, c_out)
    gc_in, gc_out = g * c_in, g * c_out
    num_groups = n // g
    x_packed = x_nchw.reshape(num_groups, gc_in, hw)

    # ---- 1/9 avg-pool divisor folded into the weight; expand block-diagonally
    #      over the G packed images so the channel mix is one matmul per image.
    w_scaled = w_oc.astype(jnp.float32) * (1.0 / 9.0)
    w_blk = w_scaled if g == 1 else jnp.kron(jnp.eye(g, dtype=jnp.float32), w_scaled)

    # ---- constant neighbor-validity masks (fetched once; constant index_map)
    lane = jnp.arange(hw, dtype=jnp.int32)
    col = lane % width
    masks = jnp.stack([
        col != 0,                 # left neighbor exists
        col != width - 1,         # right neighbor exists
        lane >= width,            # row above exists
        lane < hw - width,        # row below exists
    ]).astype(jnp.float32)        # (4, HW)

    # ---- block sizing: big DMAs, per-generation VMEM budget ----------------
    itemsize = jnp.dtype(x_nchw.dtype).itemsize
    in_group_bytes = gc_in * hw * itemsize
    out_group_bytes = gc_out * hw * itemsize
    b_blk = _pick_batch_block(num_groups, in_group_bytes)
    num_blocks = num_groups // b_blk

    need = (2 * b_blk * (in_group_bytes + out_group_bytes)     # double-buffered
            + 4 * w_blk.size + 4 * masks.size + (4 << 20))     # constants + slack
    vmem_limit = int(min(_vmem_budget_bytes(), max(need, 32 << 20)))

    kernel = functools.partial(_glom_conv2d_kernel,
                               b_blk=b_blk, width=width, hw=hw)
    out_packed = pl.pallas_call(
        kernel,
        out_shape=jax.ShapeDtypeStruct((num_groups, gc_out, hw), x_nchw.dtype),
        grid_spec=pltpu.PrefetchScalarGridSpec(
            num_scalar_prefetch=0,
            grid=(num_blocks,),
            in_specs=[
                pl.BlockSpec((b_blk, gc_in, hw), lambda i: (i, 0, 0)),
                pl.BlockSpec((gc_out, gc_in), lambda i: (0, 0)),   # weight: resident
                pl.BlockSpec((4, hw), lambda i: (0, 0)),           # masks:  resident
            ],
            out_specs=pl.BlockSpec((b_blk, gc_out, hw), lambda i: (i, 0, 0)),
        ),
        compiler_params=pltpu.CompilerParams(
            dimension_semantics=("parallel",),   # independent group-blocks
            vmem_limit_bytes=vmem_limit,
        ),
    )(x_packed, w_blk, masks)
    return out_packed.reshape(n, c_out, height, width)


def reference_nchw(x_nchw, w_oc):
    """Pure-JAX reference matching the PyTorch module semantics (NCHW)."""
    window_sum = lax.reduce_window(
        x_nchw, 0.0, lax.add,
        window_dimensions=(1, 1, 3, 3),
        window_strides=(1, 1, 1, 1),
        padding=[(0, 0), (0, 0), (1, 1), (1, 1)])
    pooled = window_sum / 9.0                                 # count_include_pad=True
    return jnp.einsum('oc,nchw->nohw', w_oc, pooled,
                      precision=jax.lax.Precision.HIGHEST)    # 1x1 conv, no bias


if __name__ == "__main__":
    N, C, H, W = 2, 4, 16, 16

    key = jax.random.PRNGKey(0)
    kx, kw = jax.random.split(key)
    x = jax.random.normal(kx, (N, C, H, W), dtype=jnp.float32)
    # Conv2d(C, C, 1, bias=False) weight is (C_out, C_in, 1, 1); keep (C_out, C_in).
    bound = 1.0 / (C ** 0.5)
    w_oc = jax.random.uniform(kw, (C, C), dtype=jnp.float32,
                              minval=-bound, maxval=bound)

    out = glom_conv2d(x, w_oc)
    out = jax.block_until_ready(out)

    ref = reference_nchw(x, w_oc)
    if not bool(jnp.allclose(out, ref, atol=1e-4, rtol=1e-4)):
        err = float(jnp.max(jnp.abs(out - ref)))
        raise AssertionError(f"Pallas kernel mismatch, max abs err = {err}")

    print("KERNEL_OK")
</pallas_src>

<mosaic_0001>
module attributes {stable_mosaic.version = 11 : i64} {
  func.func @_glom_conv2d_kernel(%arg0: i32, %arg1: memref<1x8x256xf32, #tpu.memory_space<vmem>>, %arg2: memref<8x8xf32, #tpu.memory_space<vmem>>, %arg3: memref<4x256xf32, #tpu.memory_space<vmem>>, %arg4: memref<1x8x256xf32, #tpu.memory_space<vmem>>) attributes {dimension_semantics = [#tpu.dimension_semantics<parallel>], iteration_bounds = array<i64: 1>, scalar_prefetch = 0 : i64, scratch_operands = 0 : i64, tpu.core_type = #tpu.core_type<tc>, window_params = [{transform_indices = @transform_0, window_bounds = array<i64: 1, 8, 256>}, {pipeline_mode = #tpu.pipeline_mode<synchronous>, transform_indices = @transform_1, window_bounds = array<i64: 8, 8>}, {pipeline_mode = #tpu.pipeline_mode<synchronous>, transform_indices = @transform_2, window_bounds = array<i64: 4, 256>}, {transform_indices = @transform_3, window_bounds = array<i64: 1, 8, 256>}]} {
    %c0 = arith.constant 0 : index
    %c0_0 = arith.constant 0 : index
    %0 = vector.load %arg2[%c0, %c0_0] : memref<8x8xf32, #tpu.memory_space<vmem>>, vector<8x8xf32>
    %c0_1 = arith.constant 0 : index
    %c0_2 = arith.constant 0 : index
    %1 = vector.load %arg3[%c0_1, %c0_2] : memref<4x256xf32, #tpu.memory_space<vmem>>, vector<4x256xf32>
    %2 = vector.extract_strided_slice %1 {offsets = [0, 0], sizes = [1, 256], strides = [1, 1]} : vector<4x256xf32> to vector<1x256xf32>
    %3 = vector.extract_strided_slice %1 {offsets = [1, 0], sizes = [1, 256], strides = [1, 1]} : vector<4x256xf32> to vector<1x256xf32>
    %4 = vector.extract_strided_slice %1 {offsets = [2, 0], sizes = [1, 256], strides = [1, 1]} : vector<4x256xf32> to vector<1x256xf32>
    %5 = vector.extract_strided_slice %1 {offsets = [3, 0], sizes = [1, 256], strides = [1, 1]} : vector<4x256xf32> to vector<1x256xf32>
    %c0_3 = arith.constant 0 : index
    %c0_4 = arith.constant 0 : index
    %c0_5 = arith.constant 0 : index
    %6 = vector.load %arg1[%c0_3, %c0_4, %c0_5] : memref<1x8x256xf32, #tpu.memory_space<vmem>>, vector<1x8x256xf32>
    %7 = vector.shape_cast %6 : vector<1x8x256xf32> to vector<8x256xf32>
    %c1_i32 = arith.constant 1 : i32
    %8 = tpu.dynamic_rotate %7 by %c1_i32 dim 1 : vector<8x256xf32>, i32 -> vector<8x256xf32>
    %9 = vector.broadcast %2 : vector<1x256xf32> to vector<8x256xf32>
    %10 = arith.mulf %8, %9 : vector<8x256xf32>
    %c255_i32 = arith.constant 255 : i32
    %11 = tpu.dynamic_rotate %7 by %c255_i32 dim 1 : vector<8x256xf32>, i32 -> vector<8x256xf32>
    %12 = vector.broadcast %3 : vector<1x256xf32> to vector<8x256xf32>
    %13 = arith.mulf %11, %12 : vector<8x256xf32>
    %14 = arith.addf %10, %7 : vector<8x256xf32>
    %15 = arith.addf %14, %13 : vector<8x256xf32>
    %c16_i32 = arith.constant 16 : i32
    %16 = tpu.dynamic_rotate %15 by %c16_i32 dim 1 : vector<8x256xf32>, i32 -> vector<8x256xf32>
    %17 = vector.broadcast %4 : vector<1x256xf32> to vector<8x256xf32>
    %18 = arith.mulf %16, %17 : vector<8x256xf32>
    %c240_i32 = arith.constant 240 : i32
    %19 = tpu.dynamic_rotate %15 by %c240_i32 dim 1 : vector<8x256xf32>, i32 -> vector<8x256xf32>
    %20 = vector.broadcast %5 : vector<1x256xf32> to vector<8x256xf32>
    %21 = arith.mulf %19, %20 : vector<8x256xf32>
    %22 = arith.addf %18, %15 : vector<8x256xf32>
    %23 = arith.addf %22, %21 : vector<8x256xf32>
    %cst = arith.constant dense<0.000000e+00> : vector<8x256xf32>
    %24 = tpu.matmul %0, %23, %cst {dimension_numbers = #tpu.dot_dimension_numbers<[1], [0], [0], [1], [0, 0, 1, 1], [], []>, precision = #tpu.contract_precision<fp32>} : vector<8x8xf32>, vector<8x256xf32>, vector<8x256xf32> -> vector<8x256xf32>
    %c0_6 = arith.constant 0 : index
    %c0_7 = arith.constant 0 : index
    %c0_8 = arith.constant 0 : index
    %25 = vector.load %arg4[%c0_6, %c0_7, %c0_8] : memref<1x8x256xf32, #tpu.memory_space<vmem>>, vector<1x8x256xf32>
    %26 = vector.shape_cast %25 : vector<1x8x256xf32> to vector<8x256xf32>
    %27 = vector.shape_cast %24 : vector<8x256xf32> to vector<1x8x256xf32>
    tpu.vector_store %arg4[%c0_6, %c0_7, %c0_8], %27 {strides = array<i32>} : memref<1x8x256xf32, #tpu.memory_space<vmem>>, vector<1x8x256xf32>,
    return
  }
  func.func @transform_0(%arg0: i32) -> (i32, i32, i32) {
    %c0_i32 = arith.constant 0 : i32
    %c0_i32_0 = arith.constant 0 : i32
    %c0_i32_1 = arith.constant 0 : i32
    return %arg0, %c0_i32, %c0_i32_0 : i32, i32, i32
  }
  func.func @transform_1(%arg0: i32) -> (i32, i32) {
    %c0_i32 = arith.constant 0 : i32
    %c0_i32_0 = arith.constant 0 : i32
    %c0_i32_1 = arith.constant 0 : i32
    return %c0_i32, %c0_i32_0 : i32, i32
  }
  func.func @transform_2(%arg0: i32) -> (i32, i32) {
    %c0_i32 = arith.constant 0 : i32
    %c0_i32_0 = arith.constant 0 : i32
    %c0_i32_1 = arith.constant 0 : i32
    return %c0_i32, %c0_i32_0 : i32, i32
  }
  func.func @transform_3(%arg0: i32) -> (i32, i32, i32) {
    %c0_i32 = arith.constant 0 : i32
    %c0_i32_0 = arith.constant 0 : i32
    %c0_i32_1 = arith.constant 0 : i32
    return %arg0, %c0_i32, %c0_i32_0 : i32, i32, i32
  }
}

</mosaic_0001>

<llo_original>
// kernel: tpu_custom_call.1
$region0: #{tpu_custom_call.1}
  #allocation0 [shape = 'u32[]', space=smem, size = 0x4, offset = 0x4, fixed_abs, tag = 'smem constant byte address 0x4 - core index']
  #allocation1 [shape = 'u32[144,128]{1,0:T(1,128)}', space=vmem, size = 0x12000, scoped, tag = 'internal scratch']
  %s0 = inlined_call_operand.hbm [shape: f32[1,8,256], index: 0, kind: input, shape index: {}]
  %s1 = inlined_call_operand.hbm [shape: f32[8,8], index: 1, kind: input, shape index: {}]
  %s2 = inlined_call_operand.hbm [shape: f32[4,256], index: 2, kind: input, shape index: {}]
  %s3 = inlined_call_operand.hbm [shape: f32[1,8,256], index: 3, kind: output, shape index: {}]
  %s4 = sld [smem:[#allocation0]]
  $region34: #{tpu_custom_call.1} parent=0
    _
  %s6 = ssub.s32 1, %s4
  %s7 = scalar_select 0, %s6, %s4
  $region1: #{tpu_custom_call.1} parent=0
    #allocation2 [shape = 'u8[8192]{0}', space=vmem, size = 0x2000, scoped, tag = 'input window, operand 0, single buffered']
    #allocation3 [shape = 's32[1]{0}', space=sflag, size = 0x4, scoped, tag = 'scoped memory for tpu_custom_call.1']
    #allocation4 [shape = 's32[1]{0}', space=sflag, size = 0x4, scoped, tag = 'scoped memory for tpu_custom_call.1']
    #allocation5 [shape = 'u8[4096]{0}', space=vmem, size = 0x1000, scoped, tag = 'input window, operand 1, single buffered']
    #allocation6 [shape = 's32[1]{0}', space=sflag, size = 0x4, scoped, tag = 'scoped memory for tpu_custom_call.1']
    #allocation7 [shape = 'u8[4096]{0}', space=vmem, size = 0x1000, scoped, tag = 'input window, operand 2, single buffered']
    #allocation8 [shape = 'u8[8192]{0}', space=vmem, size = 0x2000, scoped, tag = 'output window, operand 0, single buffered']
    %8 = vsyncpa [#allocation3], 0
    %9 = vsyncpa [#allocation6], 0
    %10 = vsyncpa [#allocation4], 0
    // Predicated region
    $region2: #{tpu_custom_call.1} parent=1 // pred_check
      _
    $region3: #{tpu_custom_call.1} parent=1 // pred_check_branch
      %12 = sbr.rel (0) target = $region5
    $region4: #{tpu_custom_call.1} parent=1 // pred_region
      %s14 = ssub.s32 256, 256
      %15 = vsyncadd [#allocation3], %s14
      %s17 = sshll.u32 [#allocation2], 4
      %s18 = int_to_ptr.vmem [resolvable:$true] %s17
      %20 = dma.hbm_to_vmem [thread:$0]  %s0, 256, %s18, [#allocation3]
    $region5: #{tpu_custom_call.1} parent=1 // pred_fallthru
      _
    // Predicated region
    $region6: #{tpu_custom_call.1} parent=1 // pred_check
      _
    $region7: #{tpu_custom_call.1} parent=1 // pred_check_branch
      %22 = sbr.rel (0) target = $region9
    $region8: #{tpu_custom_call.1} parent=1 // pred_region
      %s24 = ssub.s32 128, 128
      %25 = vsyncadd [#allocation6], %s24
      %s27 = sshll.u32 [#allocation5], 4
      %s28 = int_to_ptr.vmem [resolvable:$true] %s27
      %30 = dma.hbm_to_vmem [thread:$0]  %s1, 128, %s28, [#allocation6]
    $region9: #{tpu_custom_call.1} parent=1 // pred_fallthru
      _
    // Predicated region
    $region10: #{tpu_custom_call.1} parent=1 // pred_check
      _
    $region11: #{tpu_custom_call.1} parent=1 // pred_check_branch
      %32 = sbr.rel (0) target = $region13
    $region12: #{tpu_custom_call.1} parent=1 // pred_region
      %s34 = ssub.s32 128, 128
      %35 = vsyncadd [#allocation6], %s34
      %s37 = sshll.u32 [#allocation7], 4
      %s38 = int_to_ptr.vmem [resolvable:$true] %s37
      %40 = dma.hbm_to_vmem [thread:$0]  %s2, 128, %s38, [#allocation6]
    $region13: #{tpu_custom_call.1} parent=1 // pred_fallthru
      _
    // Predicated region
    $region14: #{tpu_custom_call.1} parent=1 // pred_check
      _
    $region15: #{tpu_custom_call.1} parent=1 // pred_check_branch
      %42 = sbr.rel (0) target = $region17
    $region16: #{tpu_custom_call.1} parent=1 // pred_region
      %43 = dma.done [#allocation3], 256
    $region17: #{tpu_custom_call.1} parent=1 // pred_fallthru
      _
    // Predicated region
    $region18: #{tpu_custom_call.1} parent=1 // pred_check
      _
    $region19: #{tpu_custom_call.1} parent=1 // pred_check_branch
      %45 = sbr.rel (0) target = $region21
    $region20: #{tpu_custom_call.1} parent=1 // pred_region
      %46 = dma.done [#allocation6], 128
    $region21: #{tpu_custom_call.1} parent=1 // pred_fallthru
      _
    // Predicated region
    $region22: #{tpu_custom_call.1} parent=1 // pred_check
      _
    $region23: #{tpu_custom_call.1} parent=1 // pred_check_branch
      %48 = sbr.rel (0) target = $region25
    $region24: #{tpu_custom_call.1} parent=1 // pred_region
      %49 = dma.done [#allocation6], 128
    $region25: #{tpu_custom_call.1} parent=1 // pred_fallthru
      _
    %v50 = vld [vmem:[#allocation5] sm:$0xff]
    %v51 = vld [vmem:[#allocation7] sm:$0xff]
    %v52 = vld [vmem:[#allocation2] sm:$0xff]
    %v53 = vld [vmem:[#allocation2 + $0x8] sm:$0xff]
    %54 = vrot.lane.b32.xlu0 %v52, 1
    %v55 = vpop.permute.xlu0 %54
    %56 = vrot.lane.b32.xlu0 %v53, 1
    %v57 = vpop.permute.xlu0 %56
    %v58 = vlaneseq
    %v59 = vand.u32 %v58, 127
    %vm60 = vcmp.lt.s32.totalorder %v59, 1
    %v61 = vsel %vm60, %v55, %v57
    %v62 = vsel %vm60, %v57, %v55
    %v64 = vlaneseq
    %v65 = vshrl.u32 %v64, 7
    %v66 = vsub.s32 0, %v65
    %v67 = vrot.slane %v51, %v66
    %v68 = vlaneseq
    %v69 = vshrl.u32 %v68, 7
    %v70 = vsub.s32 4, %v69
    %v71 = vrot.slane %v51, %v70
    %v74 = vlaneseq
    %v75 = vshrl.u32 %v74, 7
    %v76 = vsub.s32 0, %v75
    %v77 = vrot.slane %v67, %v76
    %v78 = vlaneseq
    %v79 = vshrl.u32 %v78, 7
    %v80 = vsub.s32 0, %v79
    %v81 = vrot.slane %v71, %v80
    %v82 = vmul.f32 %v62, %v77
    %v83 = vmul.f32 %v61, %v81
    %84 = vrot.lane.b32.xlu0 %v52, 127
    %v85 = vpop.permute.xlu0 %84
    %86 = vrot.lane.b32.xlu0 %v53, 127
    %v87 = vpop.permute.xlu0 %86
    %vm88 = vcmp.lt.s32.totalorder %v59, 127
    %v89 = vsel %vm88, %v85, %v87
    %v90 = vsel %vm88, %v87, %v85
    %v91 = vlaneseq
    %v92 = vshrl.u32 %v91, 7
    %v93 = vsub.s32 1, %v92
    %v94 = vrot.slane %v51, %v93
    %v95 = vlaneseq
    %v96 = vshrl.u32 %v95, 7
    %v97 = vsub.s32 5, %v96
    %v98 = vrot.slane %v51, %v97
    %v101 = vlaneseq
    %v102 = vshrl.u32 %v101, 7
    %v103 = vsub.s32 1, %v102
    %v104 = vrot.slane %v94, %v103
    %v105 = vlaneseq
    %v106 = vshrl.u32 %v105, 7
    %v107 = vsub.s32 1, %v106
    %v108 = vrot.slane %v98, %v107
    %v109 = vmul.f32 %v89, %v104
    %v110 = vmul.f32 %v90, %v108
    %v111 = vadd.f32 %v82, %v52
    %v112 = vadd.f32 %v83, %v53
    %v113 = vadd.f32 %v111, %v109
    %v114 = vadd.f32 %v112, %v110
    %115 = vrot.lane.b32.xlu0 %v113, 16
    %v116 = vpop.permute.xlu0 %115
    %117 = vrot.lane.b32.xlu0 %v114, 16
    %v118 = vpop.permute.xlu0 %117
    %vm119 = vcmp.lt.s32.totalorder %v59, 16
    %v120 = vsel %vm119, %v116, %v118
    %v121 = vsel %vm119, %v118, %v116
    %v122 = vlaneseq
    %v123 = vshrl.u32 %v122, 7
    %v124 = vsub.s32 2, %v123
    %v125 = vrot.slane %v51, %v124
    %v126 = vlaneseq
    %v127 = vshrl.u32 %v126, 7
    %v128 = vsub.s32 6, %v127
    %v129 = vrot.slane %v51, %v128
    %v132 = vlaneseq
    %v133 = vshrl.u32 %v132, 7
    %v134 = vsub.s32 2, %v133
    %v135 = vrot.slane %v125, %v134
    %v136 = vlaneseq
    %v137 = vshrl.u32 %v136, 7
    %v138 = vsub.s32 2, %v137
    %v139 = vrot.slane %v129, %v138
    %v140 = vmul.f32 %v121, %v135
    %v141 = vmul.f32 %v120, %v139
    %142 = vrot.lane.b32.xlu0 %v113, 112
    %v143 = vpop.permute.xlu0 %142
    %144 = vrot.lane.b32.xlu0 %v114, 112
    %v145 = vpop.permute.xlu0 %144
    %vm146 = vcmp.lt.s32.totalorder %v59, 112
    %v147 = vsel %vm146, %v143, %v145
    %v148 = vsel %vm146, %v145, %v143
    %v149 = vlaneseq
    %v150 = vshrl.u32 %v149, 7
    %v151 = vsub.s32 3, %v150
    %v152 = vrot.slane %v51, %v151
    %v153 = vlaneseq
    %v154 = vshrl.u32 %v153, 7
    %v155 = vsub.s32 7, %v154
    %v156 = vrot.slane %v51, %v155
    %v159 = vlaneseq
    %v160 = vshrl.u32 %v159, 7
    %v161 = vsub.s32 3, %v160
    %v162 = vrot.slane %v152, %v161
    %v163 = vlaneseq
    %v164 = vshrl.u32 %v163, 7
    %v165 = vsub.s32 3, %v164
    %v166 = vrot.slane %v156, %v165
    %v167 = vmul.f32 %v147, %v162
    %v168 = vmul.f32 %v148, %v166
    %v169 = vadd.f32 %v140, %v113
    %v170 = vadd.f32 %v141, %v114
    %v171 = vadd.f32 %v169, %v167
    %v172 = vadd.f32 %v170, %v168
    %vm173 = vcmask 64512
    %v175 = vsel %vm173, %v50, 0
    %177 = vmatprep.subr.mxu0 0.0
    %178 = vmatpush1.msra.mxu0 0.0
    %179 = vmatprep.subr.mxu0 0.0
    %180 = vmatpush1.msra.mxu0 0.0
    %181 = vmatprep.subr.mxu0 0.0
    %182 = vmatpush1.msra.mxu0 0.0
    %183 = vmatprep.subr.mxu0 0.0
    %184 = vmatpush1.msra.mxu0 0.0
    %185 = vmatprep.subr.mxu0 0.0
    %186 = vmatpush1.msra.mxu0 0.0
    %187 = vmatprep.subr.mxu0 0.0
    %188 = vmatpush1.msra.mxu0 0.0
    %189 = vmatprep.subr.mxu0 0.0
    %190 = vmatpush1.msra.mxu0 0.0
    %191 = vmatprep.subr.mxu0 0.0
    %192 = vmatpush1.msra.mxu0 0.0
    %193 = vmatprep.subr.mxu0 0.0
    %194 = vmatpush1.msra.mxu0 0.0
    %195 = vmatprep.subr.mxu0 0.0
    %196 = vmatpush1.msra.mxu0 0.0
    %197 = vmatprep.subr.mxu0 0.0
    %198 = vmatpush1.msra.mxu0 0.0
    %199 = vmatprep.subr.mxu0 0.0
    %200 = vmatpush1.msra.mxu0 0.0
    %201 = vmatprep.subr.mxu0 0.0
    %202 = vmatpush1.msra.mxu0 0.0
    %203 = vmatprep.subr.mxu0 0.0
    %204 = vmatpush1.msra.mxu0 0.0
    %205 = vmatprep.subr.mxu0 0.0
    %206 = vmatpush1.msra.mxu0 0.0
    %v207 = vand.u32 %v172, 4294901760
    %208 = vmatprep.subr.mxu0 %v207
    %v209 = vand.u32 %v171, 4294901760
    %210 = vmatpush1.msra.mxu0 %v209
    %211 = vmatprep.subr.mxu0 0.0
    %212 = vmatpush2.msra.mxu0 0.0
    %213 = vmatprep.subr.mxu0 0.0
    %214 = vmatpush2.msra.mxu0 0.0
    %215 = vmatprep.subr.mxu0 0.0
    %216 = vmatpush2.msra.mxu0 0.0
    %217 = vmatprep.subr.mxu0 0.0
    %218 = vmatpush2.msra.mxu0 0.0
    %219 = vmatprep.subr.mxu0 0.0
    %220 = vmatpush2.msra.mxu0 0.0
    %221 = vmatprep.subr.mxu0 0.0
    %222 = vmatpush2.msra.mxu0 0.0
    %223 = vmatprep.subr.mxu0 0.0
    %224 = vmatpush2.msra.mxu0 0.0
    %225 = vmatprep.subr.mxu0 0.0
    %226 = vmatpush2.msra.mxu0 0.0
    %227 = vmatprep.subr.mxu0 0.0
    %228 = vmatpush2.msra.mxu0 0.0
    %229 = vmatprep.subr.mxu0 0.0
    %230 = vmatpush2.msra.mxu0 0.0
    %231 = vmatprep.subr.mxu0 0.0
    %232 = vmatpush2.msra.mxu0 0.0
    %233 = vmatprep.subr.mxu0 0.0
    %234 = vmatpush2.msra.mxu0 0.0
    %235 = vmatprep.subr.mxu0 0.0
    %236 = vmatpush2.msra.mxu0 0.0
    %237 = vmatprep.subr.mxu0 0.0
    %238 = vmatpush2.msra.mxu0 0.0
    %239 = vmatprep.subr.mxu0 0.0
    %240 = vmatpush2.msra.mxu0 0.0
    %241 = vmatprep.subr.mxu0 0.0
    %242 = vmatpush2.msra.mxu0 0.0
    %243 = vmatprep.mubr.f32.mxu0 0.0
    %v244 = vand.u32 %v175, 4294901760
    %v245 = vsub.f32 %v175, %v244
    %v246 = vand.u32 %v245, 4294901760
    %v247 = vsub.f32 %v245, %v246
    %v248 = vand.u32 %v247, 4294901760
    %249 = vmatmul.mubr.f32.gmra.mxu0 %v248
    %v250 = vpop.f32.mrf.mxu0
    %v251 = vadd.f32 0.0, %v250
    %v252 = vpop.f32.mrf.mxu0
    %v253 = vadd.f32 0.0, %v252
    %254 = vdwg.mxu0
    %255 = vmatprep.subr.mxu0 0.0
    %256 = vmatpush1.msra.mxu0 0.0
    %257 = vmatprep.subr.mxu0 0.0
    %258 = vmatpush1.msra.mxu0 0.0
    %259 = vmatprep.subr.mxu0 0.0
    %260 = vmatpush1.msra.mxu0 0.0
    %261 = vmatprep.subr.mxu0 0.0
    %262 = vmatpush1.msra.mxu0 0.0
    %263 = vmatprep.subr.mxu0 0.0
    %264 = vmatpush1.msra.mxu0 0.0
    %265 = vmatprep.subr.mxu0 0.0
    %266 = vmatpush1.msra.mxu0 0.0
    %267 = vmatprep.subr.mxu0 0.0
    %268 = vmatpush1.msra.mxu0 0.0
    %269 = vmatprep.subr.mxu0 0.0
    %270 = vmatpush1.msra.mxu0 0.0
    %271 = vmatprep.subr.mxu0 0.0
    %272 = vmatpush1.msra.mxu0 0.0
    %273 = vmatprep.subr.mxu0 0.0
    %274 = vmatpush1.msra.mxu0 0.0
    %275 = vmatprep.subr.mxu0 0.0
    %276 = vmatpush1.msra.mxu0 0.0
    %277 = vmatprep.subr.mxu0 0.0
    %278 = vmatpush1.msra.mxu0 0.0
    %279 = vmatprep.subr.mxu0 0.0
    %280 = vmatpush1.msra.mxu0 0.0
    %281 = vmatprep.subr.mxu0 0.0
    %282 = vmatpush1.msra.mxu0 0.0
    %283 = vmatprep.subr.mxu0 0.0
    %284 = vmatpush1.msra.mxu0 0.0
    %v285 = vand.u32 %v172, 4294901760
    %v286 = vsub.f32 %v172, %v285
    %v287 = vand.u32 %v286, 4294901760
    %v288 = vsub.f32 %v286, %v287
    %v289 = vand.u32 %v288, 4294901760
    %290 = vmatprep.subr.mxu0 %v289
    %v291 = vand.u32 %v171, 4294901760
    %v292 = vsub.f32 %v171, %v291
    %v293 = vand.u32 %v292, 4294901760
    %v294 = vsub.f32 %v292, %v293
    %v295 = vand.u32 %v294, 4294901760
    %296 = vmatpush1.msra.mxu0 %v295
    %297 = vmatprep.subr.mxu0 0.0
    %298 = vmatpush2.msra.mxu0 0.0
    %299 = vmatprep.subr.mxu0 0.0
    %300 = vmatpush2.msra.mxu0 0.0
    %301 = vmatprep.subr.mxu0 0.0
    %302 = vmatpush2.msra.mxu0 0.0
    %303 = vmatprep.subr.mxu0 0.0
    %304 = vmatpush2.msra.mxu0 0.0
    %305 = vmatprep.subr.mxu0 0.0
    %306 = vmatpush2.msra.mxu0 0.0
    %307 = vmatprep.subr.mxu0 0.0
    %308 = vmatpush2.msra.mxu0 0.0
    %309 = vmatprep.subr.mxu0 0.0
    %310 = vmatpush2.msra.mxu0 0.0
    %311 = vmatprep.subr.mxu0 0.0
    %312 = vmatpush2.msra.mxu0 0.0
    %313 = vmatprep.subr.mxu0 0.0
    %314 = vmatpush2.msra.mxu0 0.0
    %315 = vmatprep.subr.mxu0 0.0
    %316 = vmatpush2.msra.mxu0 0.0
    %317 = vmatprep.subr.mxu0 0.0
    %318 = vmatpush2.msra.mxu0 0.0
    %319 = vmatprep.subr.mxu0 0.0
    %320 = vmatpush2.msra.mxu0 0.0
    %321 = vmatprep.subr.mxu0 0.0
    %322 = vmatpush2.msra.mxu0 0.0
    %323 = vmatprep.subr.mxu0 0.0
    %324 = vmatpush2.msra.mxu0 0.0
    %325 = vmatprep.subr.mxu0 0.0
    %326 = vmatpush2.msra.mxu0 0.0
    %327 = vmatprep.subr.mxu0 0.0
    %328 = vmatpush2.msra.mxu0 0.0
    %329 = vmatprep.mubr.f32.mxu0 0.0
    %v330 = vand.u32 %v175, 4294901760
    %331 = vmatmul.mubr.f32.gmra.mxu0 %v330
    %v332 = vpop.f32.mrf.mxu0
    %v333 = vadd.f32 %v251, %v332
    %v334 = vpop.f32.mrf.mxu0
    %v335 = vadd.f32 %v253, %v334
    %336 = vdwg.mxu0
    %337 = vmatprep.subr.mxu0 0.0
    %338 = vmatpush1.msra.mxu0 0.0
    %339 = vmatprep.subr.mxu0 0.0
    %340 = vmatpush1.msra.mxu0 0.0
    %341 = vmatprep.subr.mxu0 0.0
    %342 = vmatpush1.msra.mxu0 0.0
    %343 = vmatprep.subr.mxu0 0.0
    %344 = vmatpush1.msra.mxu0 0.0
    %345 = vmatprep.subr.mxu0 0.0
    %346 = vmatpush1.msra.mxu0 0.0
    %347 = vmatprep.subr.mxu0 0.0
    %348 = vmatpush1.msra.mxu0 0.0
    %349 = vmatprep.subr.mxu0 0.0
    %350 = vmatpush1.msra.mxu0 0.0
    %351 = vmatprep.subr.mxu0 0.0
    %352 = vmatpush1.msra.mxu0 0.0
    %353 = vmatprep.subr.mxu0 0.0
    %354 = vmatpush1.msra.mxu0 0.0
    %355 = vmatprep.subr.mxu0 0.0
    %356 = vmatpush1.msra.mxu0 0.0
    %357 = vmatprep.subr.mxu0 0.0
    %358 = vmatpush1.msra.mxu0 0.0
    %359 = vmatprep.subr.mxu0 0.0
    %360 = vmatpush1.msra.mxu0 0.0
    %361 = vmatprep.subr.mxu0 0.0
    %362 = vmatpush1.msra.mxu0 0.0
    %363 = vmatprep.subr.mxu0 0.0
    %364 = vmatpush1.msra.mxu0 0.0
    %365 = vmatprep.subr.mxu0 0.0
    %366 = vmatpush1.msra.mxu0 0.0
    %v367 = vand.u32 %v172, 4294901760
    %v368 = vsub.f32 %v172, %v367
    %369 = vmatprep.subr.mxu0 %v368
    %v370 = vand.u32 %v171, 4294901760
    %v371 = vsub.f32 %v171, %v370
    %372 = vmatpush1.msra.mxu0 %v371
    %373 = vmatprep.subr.mxu0 0.0
    %374 = vmatpush2.msra.mxu0 0.0
    %375 = vmatprep.subr.mxu0 0.0
    %376 = vmatpush2.msra.mxu0 0.0
    %377 = vmatprep.subr.mxu0 0.0
    %378 = vmatpush2.msra.mxu0 0.0
    %379 = vmatprep.subr.mxu0 0.0
    %380 = vmatpush2.msra.mxu0 0.0
    %381 = vmatprep.subr.mxu0 0.0
    %382 = vmatpush2.msra.mxu0 0.0
    %383 = vmatprep.subr.mxu0 0.0
    %384 = vmatpush2.msra.mxu0 0.0
    %385 = vmatprep.subr.mxu0 0.0
    %386 = vmatpush2.msra.mxu0 0.0
    %387 = vmatprep.subr.mxu0 0.0
    %388 = vmatpush2.msra.mxu0 0.0
    %389 = vmatprep.subr.mxu0 0.0
    %390 = vmatpush2.msra.mxu0 0.0
    %391 = vmatprep.subr.mxu0 0.0
    %392 = vmatpush2.msra.mxu0 0.0
    %393 = vmatprep.subr.mxu0 0.0
    %394 = vmatpush2.msra.mxu0 0.0
    %395 = vmatprep.subr.mxu0 0.0
    %396 = vmatpush2.msra.mxu0 0.0
    %397 = vmatprep.subr.mxu0 0.0
    %398 = vmatpush2.msra.mxu0 0.0
    %399 = vmatprep.subr.mxu0 0.0
    %400 = vmatpush2.msra.mxu0 0.0
    %401 = vmatprep.subr.mxu0 0.0
    %402 = vmatpush2.msra.mxu0 0.0
    %403 = vmatprep.subr.mxu0 0.0
    %404 = vmatpush2.msra.mxu0 0.0
    %405 = vmatprep.mubr.f32.mxu0 0.0
    %v406 = vand.u32 %v175, 4294901760
    %v407 = vsub.f32 %v175, %v406
    %408 = vmatmul.mubr.f32.gmra.mxu0 %v407
    %v409 = vpop.f32.mrf.mxu0
    %v410 = vadd.f32 %v333, %v409
    %v411 = vpop.f32.mrf.mxu0
    %v412 = vadd.f32 %v335, %v411
    %413 = vdwg.mxu0
    %414 = vmatprep.subr.mxu0 0.0
    %415 = vmatpush1.msra.mxu0 0.0
    %416 = vmatprep.subr.mxu0 0.0
    %417 = vmatpush1.msra.mxu0 0.0
    %418 = vmatprep.subr.mxu0 0.0
    %419 = vmatpush1.msra.mxu0 0.0
    %420 = vmatprep.subr.mxu0 0.0
    %421 = vmatpush1.msra.mxu0 0.0
    %422 = vmatprep.subr.mxu0 0.0
    %423 = vmatpush1.msra.mxu0 0.0
    %424 = vmatprep.subr.mxu0 0.0
    %425 = vmatpush1.msra.mxu0 0.0
    %426 = vmatprep.subr.mxu0 0.0
    %427 = vmatpush1.msra.mxu0 0.0
    %428 = vmatprep.subr.mxu0 0.0
    %429 = vmatpush1.msra.mxu0 0.0
    %430 = vmatprep.subr.mxu0 0.0
    %431 = vmatpush1.msra.mxu0 0.0
    %432 = vmatprep.subr.mxu0 0.0
    %433 = vmatpush1.msra.mxu0 0.0
    %434 = vmatprep.subr.mxu0 0.0
    %435 = vmatpush1.msra.mxu0 0.0
    %436 = vmatprep.subr.mxu0 0.0
    %437 = vmatpush1.msra.mxu0 0.0
    %438 = vmatprep.subr.mxu0 0.0
    %439 = vmatpush1.msra.mxu0 0.0
    %440 = vmatprep.subr.mxu0 0.0
    %441 = vmatpush1.msra.mxu0 0.0
    %442 = vmatprep.subr.mxu0 0.0
    %443 = vmatpush1.msra.mxu0 0.0
    %v444 = vand.u32 %v172, 4294901760
    %445 = vmatprep.subr.mxu0 %v444
    %v446 = vand.u32 %v171, 4294901760
    %447 = vmatpush1.msra.mxu0 %v446
    %448 = vmatprep.subr.mxu0 0.0
    %449 = vmatpush2.msra.mxu0 0.0
    %450 = vmatprep.subr.mxu0 0.0
    %451 = vmatpush2.msra.mxu0 0.0
    %452 = vmatprep.subr.mxu0 0.0
    %453 = vmatpush2.msra.mxu0 0.0
    %454 = vmatprep.subr.mxu0 0.0
    %455 = vmatpush2.msra.mxu0 0.0
    %456 = vmatprep.subr.mxu0 0.0
    %457 = vmatpush2.msra.mxu0 0.0
    %458 = vmatprep.subr.mxu0 0.0
    %459 = vmatpush2.msra.mxu0 0.0
    %460 = vmatprep.subr.mxu0 0.0
    %461 = vmatpush2.msra.mxu0 0.0
    %462 = vmatprep.subr.mxu0 0.0
    %463 = vmatpush2.msra.mxu0 0.0
    %464 = vmatprep.subr.mxu0 0.0
    %465 = vmatpush2.msra.mxu0 0.0
    %466 = vmatprep.subr.mxu0 0.0
    %467 = vmatpush2.msra.mxu0 0.0
    %468 = vmatprep.subr.mxu0 0.0
    %469 = vmatpush2.msra.mxu0 0.0
    %470 = vmatprep.subr.mxu0 0.0
    %471 = vmatpush2.msra.mxu0 0.0
    %472 = vmatprep.subr.mxu0 0.0
    %473 = vmatpush2.msra.mxu0 0.0
    %474 = vmatprep.subr.mxu0 0.0
    %475 = vmatpush2.msra.mxu0 0.0
    %476 = vmatprep.subr.mxu0 0.0
    %477 = vmatpush2.msra.mxu0 0.0
    %478 = vmatprep.subr.mxu0 0.0
    %479 = vmatpush2.msra.mxu0 0.0
    %480 = vmatprep.mubr.f32.mxu0 0.0
    %v481 = vand.u32 %v175, 4294901760
    %v482 = vsub.f32 %v175, %v481
    %v483 = vand.u32 %v482, 4294901760
    %484 = vmatmul.mubr.f32.gmra.mxu0 %v483
    %v485 = vpop.f32.mrf.mxu0
    %v486 = vadd.f32 %v410, %v485
    %v487 = vpop.f32.mrf.mxu0
    %v488 = vadd.f32 %v412, %v487
    %489 = vdwg.mxu0
    %490 = vmatprep.subr.mxu0 0.0
    %491 = vmatpush1.msra.mxu0 0.0
    %492 = vmatprep.subr.mxu0 0.0
    %493 = vmatpush1.msra.mxu0 0.0
    %494 = vmatprep.subr.mxu0 0.0
    %495 = vmatpush1.msra.mxu0 0.0
    %496 = vmatprep.subr.mxu0 0.0
    %497 = vmatpush1.msra.mxu0 0.0
    %498 = vmatprep.subr.mxu0 0.0
    %499 = vmatpush1.msra.mxu0 0.0
    %500 = vmatprep.subr.mxu0 0.0
    %501 = vmatpush1.msra.mxu0 0.0
    %502 = vmatprep.subr.mxu0 0.0
    %503 = vmatpush1.msra.mxu0 0.0
    %504 = vmatprep.subr.mxu0 0.0
    %505 = vmatpush1.msra.mxu0 0.0
    %506 = vmatprep.subr.mxu0 0.0
    %507 = vmatpush1.msra.mxu0 0.0
    %508 = vmatprep.subr.mxu0 0.0
    %509 = vmatpush1.msra.mxu0 0.0
    %510 = vmatprep.subr.mxu0 0.0
    %511 = vmatpush1.msra.mxu0 0.0
    %512 = vmatprep.subr.mxu0 0.0
    %513 = vmatpush1.msra.mxu0 0.0
    %514 = vmatprep.subr.mxu0 0.0
    %515 = vmatpush1.msra.mxu0 0.0
    %516 = vmatprep.subr.mxu0 0.0
    %517 = vmatpush1.msra.mxu0 0.0
    %518 = vmatprep.subr.mxu0 0.0
    %519 = vmatpush1.msra.mxu0 0.0
    %v520 = vand.u32 %v172, 4294901760
    %v521 = vsub.f32 %v172, %v520
    %v522 = vand.u32 %v521, 4294901760
    %523 = vmatprep.subr.mxu0 %v522
    %v524 = vand.u32 %v171, 4294901760
    %v525 = vsub.f32 %v171, %v524
    %v526 = vand.u32 %v525, 4294901760
    %527 = vmatpush1.msra.mxu0 %v526
    %528 = vmatprep.subr.mxu0 0.0
    %529 = vmatpush2.msra.mxu0 0.0
    %530 = vmatprep.subr.mxu0 0.0
    %531 = vmatpush2.msra.mxu0 0.0
    %532 = vmatprep.subr.mxu0 0.0
    %533 = vmatpush2.msra.mxu0 0.0
    %534 = vmatprep.subr.mxu0 0.0
    %535 = vmatpush2.msra.mxu0 0.0
    %536 = vmatprep.subr.mxu0 0.0
    %537 = vmatpush2.msra.mxu0 0.0
    %538 = vmatprep.subr.mxu0 0.0
    %539 = vmatpush2.msra.mxu0 0.0
    %540 = vmatprep.subr.mxu0 0.0
    %541 = vmatpush2.msra.mxu0 0.0
    %542 = vmatprep.subr.mxu0 0.0
    %543 = vmatpush2.msra.mxu0 0.0
    %544 = vmatprep.subr.mxu0 0.0
    %545 = vmatpush2.msra.mxu0 0.0
    %546 = vmatprep.subr.mxu0 0.0
    %547 = vmatpush2.msra.mxu0 0.0
    %548 = vmatprep.subr.mxu0 0.0
    %549 = vmatpush2.msra.mxu0 0.0
    %550 = vmatprep.subr.mxu0 0.0
    %551 = vmatpush2.msra.mxu0 0.0
    %552 = vmatprep.subr.mxu0 0.0
    %553 = vmatpush2.msra.mxu0 0.0
    %554 = vmatprep.subr.mxu0 0.0
    %555 = vmatpush2.msra.mxu0 0.0
    %556 = vmatprep.subr.mxu0 0.0
    %557 = vmatpush2.msra.mxu0 0.0
    %558 = vmatprep.subr.mxu0 0.0
    %559 = vmatpush2.msra.mxu0 0.0
    %560 = vmatprep.mubr.f32.mxu0 0.0
    %v561 = vand.u32 %v175, 4294901760
    %562 = vmatmul.mubr.f32.gmra.mxu0 %v561
    %v563 = vpop.f32.mrf.mxu0
    %v564 = vadd.f32 %v486, %v563
    %v565 = vpop.f32.mrf.mxu0
    %v566 = vadd.f32 %v488, %v565
    %567 = vdwg.mxu0
    %568 = vmatprep.subr.mxu0 0.0
    %569 = vmatpush1.msra.mxu0 0.0
    %570 = vmatprep.subr.mxu0 0.0
    %571 = vmatpush1.msra.mxu0 0.0
    %572 = vmatprep.subr.mxu0 0.0
    %573 = vmatpush1.msra.mxu0 0.0
    %574 = vmatprep.subr.mxu0 0.0
    %575 = vmatpush1.msra.mxu0 0.0
    %576 = vmatprep.subr.mxu0 0.0
    %577 = vmatpush1.msra.mxu0 0.0
    %578 = vmatprep.subr.mxu0 0.0
    %579 = vmatpush1.msra.mxu0 0.0
    %580 = vmatprep.subr.mxu0 0.0
    %581 = vmatpush1.msra.mxu0 0.0
    %582 = vmatprep.subr.mxu0 0.0
    %583 = vmatpush1.msra.mxu0 0.0
    %584 = vmatprep.subr.mxu0 0.0
    %585 = vmatpush1.msra.mxu0 0.0
    %586 = vmatprep.subr.mxu0 0.0
    %587 = vmatpush1.msra.mxu0 0.0
    %588 = vmatprep.subr.mxu0 0.0
    %589 = vmatpush1.msra.mxu0 0.0
    %590 = vmatprep.subr.mxu0 0.0
    %591 = vmatpush1.msra.mxu0 0.0
    %592 = vmatprep.subr.mxu0 0.0
    %593 = vmatpush1.msra.mxu0 0.0
    %594 = vmatprep.subr.mxu0 0.0
    %595 = vmatpush1.msra.mxu0 0.0
    %596 = vmatprep.subr.mxu0 0.0
    %597 = vmatpush1.msra.mxu0 0.0
    %v598 = vand.u32 %v172, 4294901760
    %599 = vmatprep.subr.mxu0 %v598
    %v600 = vand.u32 %v171, 4294901760
    %601 = vmatpush1.msra.mxu0 %v600
    %602 = vmatprep.subr.mxu0 0.0
    %603 = vmatpush2.msra.mxu0 0.0
    %604 = vmatprep.subr.mxu0 0.0
    %605 = vmatpush2.msra.mxu0 0.0
    %606 = vmatprep.subr.mxu0 0.0
    %607 = vmatpush2.msra.mxu0 0.0
    %608 = vmatprep.subr.mxu0 0.0
    %609 = vmatpush2.msra.mxu0 0.0
    %610 = vmatprep.subr.mxu0 0.0
    %611 = vmatpush2.msra.mxu0 0.0
    %612 = vmatprep.subr.mxu0 0.0
    %613 = vmatpush2.msra.mxu0 0.0
    %614 = vmatprep.subr.mxu0 0.0
    %615 = vmatpush2.msra.mxu0 0.0
    %616 = vmatprep.subr.mxu0 0.0
    %617 = vmatpush2.msra.mxu0 0.0
    %618 = vmatprep.subr.mxu0 0.0
    %619 = vmatpush2.msra.mxu0 0.0
    %620 = vmatprep.subr.mxu0 0.0
    %621 = vmatpush2.msra.mxu0 0.0
    %622 = vmatprep.subr.mxu0 0.0
    %623 = vmatpush2.msra.mxu0 0.0
    %624 = vmatprep.subr.mxu0 0.0
    %625 = vmatpush2.msra.mxu0 0.0
    %626 = vmatprep.subr.mxu0 0.0
    %627 = vmatpush2.msra.mxu0 0.0
    %628 = vmatprep.subr.mxu0 0.0
    %629 = vmatpush2.msra.mxu0 0.0
    %630 = vmatprep.subr.mxu0 0.0
    %631 = vmatpush2.msra.mxu0 0.0
    %632 = vmatprep.subr.mxu0 0.0
    %633 = vmatpush2.msra.mxu0 0.0
    %634 = vmatprep.mubr.f32.mxu0 0.0
    %v635 = vand.u32 %v175, 4294901760
    %636 = vmatmul.mubr.f32.gmra.mxu0 %v635
    %v637 = vpop.f32.mrf.mxu0
    %v638 = vadd.f32 %v564, %v637
    %v639 = vpop.f32.mrf.mxu0
    %v640 = vadd.f32 %v566, %v639
    %641 = vdwg.mxu0
    %642 = vst [vmem:[#allocation8] sm:$0xff] %v638
    %643 = vst [vmem:[#allocation8 + $0x8] sm:$0xff] %v640
    // Predicated region
    $region26: #{tpu_custom_call.1} parent=1 // pred_check
      _
    $region27: #{tpu_custom_call.1} parent=1 // pred_check_branch
      %645 = sbr.rel (0) target = $region29
    $region28: #{tpu_custom_call.1} parent=1 // pred_region
      %s647 = ssub.s32 256, 256
      %648 = vsyncadd [#allocation4], %s647
      %s650 = sshll.u32 [#allocation8], 4
      %s651 = int_to_ptr.vmem [resolvable:$true] %s650
      %653 = dma.vmem_to_hbm [thread:$0]  %s651, 256, %s3, [#allocation4]
    $region29: #{tpu_custom_call.1} parent=1 // pred_fallthru
      _
    // Predicated region
    $region30: #{tpu_custom_call.1} parent=1 // pred_check
      _
    $region31: #{tpu_custom_call.1} parent=1 // pred_check_branch
      %655 = sbr.rel (0) target = $region33
    $region32: #{tpu_custom_call.1} parent=1 // pred_region
      %656 = dma.done [#allocation4], 256
    $region33: #{tpu_custom_call.1} parent=1 // pred_fallthru
      _
    %657 = vsyncpa [#allocation3], 1
    %658 = vsyncpa [#allocation6], 1
    %659 = vsyncpa [#allocation4], 1

</llo_original>
